<compile_context>
chip_gen: v7x
topology: tpu7x:2x2x1
jax: 0.10.0
libtpu: 0.0.40
codegen_flags: <defaults>
</compile_context>

<pallas_src>
import jax
import jax.numpy as jnp
from jax.experimental import pallas as pl
from jax.experimental.pallas import tpu as pltpu


def _scale_kernel(scale_ref, x_ref, o_ref):
    # scale_ref: (1, 1) f32 scalar in SMEM; x_ref / o_ref: tile in VMEM.
    s = scale_ref[0, 0]                                  # hoisted f32 scalar read
    o_ref[...] = (x_ref[...] * s).astype(o_ref.dtype)    # cast product, not the scalar


def _sublane_multiple(dtype):
    # Sub-32-bit dtypes pack along sublanes: f32 -> 8, bf16/f16 -> 16, int8/fp8 -> 32.
    itemsize = jnp.dtype(dtype).itemsize
    return 8 * max(1, 4 // itemsize)


def _vmem_budget():
    """Return (per-buffer block bytes, vmem_limit_bytes) sized for this TPU generation."""
    try:
        vmem = pltpu.get_tpu_info().vmem_capacity_bytes
    except Exception:
        vmem = 64 * 1024 * 1024                          # conservative (v7x-sized) fallback
    if vmem >= 100 * 1024 * 1024:
        # v5e / v6e: 128 MiB VMEM -> 2 arrays x 2 buffers x 16 MiB = 64 MiB pipelined.
        return 16 * 1024 * 1024, 96 * 1024 * 1024
    # v7x: 64 MiB VMEM per TC -> cap blocks at 8 MiB, pipelined footprint 32 MiB.
    return 8 * 1024 * 1024, 48 * 1024 * 1024


def scale_forward(x, scale, *, donate_input=False):
    """x: any-shape float array (pysot uses NCHW); scale: shape-(1,) f32 parameter."""
    orig_shape = x.shape
    orig_dtype = x.dtype
    total = x.size
    itemsize = jnp.dtype(orig_dtype).itemsize
    block_bytes, vmem_limit = _vmem_budget()

    scale2d = scale.reshape(1, 1).astype(jnp.float32)    # keep parameter precision (f32)
    alias = {1: 0} if donate_input else {}

    # ---- choose a lane-dense width K (multiple of 128) that divides the element count.
    K = None
    for cand in (2048, 1024, 512, 256, 128):
        if total % cand == 0:
            K = cand
            break

    if K is not None:
        # Main path: lane-dense 2D slab (M, K); unmasked full-width stores.
        M = total // K
        operand = x.reshape(M, K)
        sub = _sublane_multiple(orig_dtype)
        # Row tile sized to the generation's per-buffer byte budget ...
        TM = max(1, block_bytes // (K * itemsize))
        # ... but keep >= ~4 grid steps when the tensor is > ~2 MiB so DMA-in /
        # multiply / DMA-out overlap and v7x's two TCs both get work.
        if total * itemsize > 2 * 1024 * 1024:
            TM = min(TM, pl.cdiv(M, 4))
        TM = min(TM, M)
        if TM < M:
            TM = max(sub, (TM // sub) * sub)             # dtype-specific sublane multiple
        grid = (pl.cdiv(M, TM),)
        in_block = pl.BlockSpec((TM, K), lambda i: (i, 0))
        out_block = pl.BlockSpec((TM, K), lambda i: (i, 0))
        out_shape = jax.ShapeDtypeStruct((M, K), orig_dtype)
    else:
        # Ragged path (element count not divisible by 128): view as (1, total) and let
        # Pallas mask the partial last block — no wrapper-side pad/slice copies.
        BK = min(64 * 1024, pl.cdiv(total, 128) * 128)
        operand = x.reshape(1, total)
        grid = (pl.cdiv(total, BK),)
        in_block = pl.BlockSpec((1, BK), lambda i: (0, i))
        out_block = pl.BlockSpec((1, BK), lambda i: (0, i))
        out_shape = jax.ShapeDtypeStruct((1, total), orig_dtype)

    out2d = pl.pallas_call(
        _scale_kernel,
        out_shape=out_shape,
        grid_spec=pltpu.PrefetchScalarGridSpec(
            num_scalar_prefetch=0,
            grid=grid,
            in_specs=[
                pl.BlockSpec(memory_space=pltpu.MemorySpace.SMEM),  # f32 scalar
                in_block,
            ],
            out_specs=out_block,
        ),
        compiler_params=pltpu.CompilerParams(
            # TODO(synk): verify on a v7x trace that "parallel" shards the row grid across
            # both TensorCores; if not, switch to pltpu.CORE_PARALLEL / pl.core_map.
            dimension_semantics=("parallel",),
            vmem_limit_bytes=vmem_limit,
        ),
        cost_estimate=pl.CostEstimate(
            flops=total,
            transcendentals=0,
            bytes_accessed=2 * total * itemsize,          # pure HBM streaming
        ),
        input_output_aliases=alias,
    )(scale2d, operand)

    return out2d.reshape(orig_shape)


if __name__ == "__main__":
    key = jax.random.PRNGKey(0)
    x = jax.random.normal(key, (2, 4, 16, 16), dtype=jnp.float32)

    # Matches Scale(init_value=...) semantics; non-trivial value so the multiply is visible.
    init_value = 2.5
    scale_param = jnp.array([init_value], dtype=jnp.float32)

    out = scale_forward(x, scale_param)
    out = jax.block_until_ready(out)

    ref = x * init_value
    assert out.shape == x.shape and out.dtype == x.dtype
    assert jnp.allclose(out, ref, atol=1e-6), "mismatch vs reference"

    print("KERNEL_OK")
</pallas_src>

<mosaic_0001>
module attributes {stable_mosaic.version = 11 : i64} {
  func.func @_scale_kernel(%arg0: i32, %arg1: memref<1x1xf32, #tpu.memory_space<smem>>, %arg2: memref<1x2048xf32, #tpu.memory_space<vmem>>, %arg3: memref<1x2048xf32, #tpu.memory_space<vmem>>) attributes {dimension_semantics = [#tpu.dimension_semantics<parallel>], iteration_bounds = array<i64: 1>, scalar_prefetch = 0 : i64, scratch_operands = 0 : i64, tpu.core_type = #tpu.core_type<tc>, window_params = [{transform_indices = @transform_0, window_bounds = array<i64: 1, 1>}, {transform_indices = @transform_1, window_bounds = array<i64: 1, 2048>}, {transform_indices = @transform_2, window_bounds = array<i64: 1, 2048>}]} {
    %c0 = arith.constant 0 : index
    %c0_0 = arith.constant 0 : index
    %0 = memref.load %arg1[%c0, %c0_0] : memref<1x1xf32, #tpu.memory_space<smem>>
    %c0_1 = arith.constant 0 : index
    %c0_2 = arith.constant 0 : index
    %1 = vector.load %arg2[%c0_1, %c0_2] : memref<1x2048xf32, #tpu.memory_space<vmem>>, vector<1x2048xf32>
    %2 = vector.broadcast %0 : f32 to vector<1x2048xf32>
    %3 = arith.mulf %1, %2 : vector<1x2048xf32>
    %c0_3 = arith.constant 0 : index
    %c0_4 = arith.constant 0 : index
    %4 = vector.load %arg3[%c0_3, %c0_4] : memref<1x2048xf32, #tpu.memory_space<vmem>>, vector<1x2048xf32>
    tpu.vector_store %arg3[%c0_3, %c0_4], %3 {strides = array<i32>} : memref<1x2048xf32, #tpu.memory_space<vmem>>, vector<1x2048xf32>,
    return
  }
  func.func @transform_0(%arg0: i32) -> (i32, i32) {
    %c0_i32 = arith.constant 0 : i32
    %c0_i32_0 = arith.constant 0 : i32
    %c0_i32_1 = arith.constant 0 : i32
    return %c0_i32, %c0_i32_0 : i32, i32
  }
  func.func @transform_1(%arg0: i32) -> (i32, i32) {
    %c0_i32 = arith.constant 0 : i32
    %c0_i32_0 = arith.constant 0 : i32
    return %arg0, %c0_i32 : i32, i32
  }
  func.func @transform_2(%arg0: i32) -> (i32, i32) {
    %c0_i32 = arith.constant 0 : i32
    %c0_i32_0 = arith.constant 0 : i32
    return %arg0, %c0_i32 : i32, i32
  }
}

</mosaic_0001>

<llo_original>
// kernel: tpu_custom_call.1
$region0: #{tpu_custom_call.1}
  #allocation0 [shape = 'u32[]', space=smem, size = 0x4, offset = 0x4, fixed_abs, tag = 'smem constant byte address 0x4 - core index']
  #allocation1 [shape = 'u32[144,128]{1,0:T(1,128)}', space=vmem, size = 0x12000, scoped, tag = 'internal scratch']
  #allocation2 [shape = 'f32[1,1]{1,0:T(1,128)S(6)}', space=smem, size = 0x200, scoped, tag = 'scoped memory for tpu_custom_call.1']
  %s0 = inlined_call_operand.<no memory space> [shape: f32[1,1], index: 0, kind: input, shape index: {}]
  %s1 = inlined_call_operand.hbm [shape: f32[1,2048], index: 1, kind: input, shape index: {}]
  %s2 = inlined_call_operand.hbm [shape: f32[1,2048], index: 2, kind: output, shape index: {}]
  %s3 = sld [smem:[#allocation0]]
  $region22: #{tpu_custom_call.1} parent=0
    _
  %s5 = ssub.s32 1, %s3
  %s6 = scalar_select 0, %s5, %s3
  %7 = sst [smem:[#allocation2]] %s0
  $region1: #{tpu_custom_call.1} parent=0
    #allocation3 [shape = 'u8[8192]{0}', space=vmem, size = 0x2000, scoped, tag = 'input window, operand 1, single buffered']
    #allocation4 [shape = 's32[1]{0}', space=sflag, size = 0x4, scoped, tag = 'scoped memory for tpu_custom_call.1']
    #allocation5 [shape = 's32[1]{0}', space=sflag, size = 0x4, scoped, tag = 'scoped memory for tpu_custom_call.1']
    #allocation6 [shape = 'u8[8192]{0}', space=vmem, size = 0x2000, scoped, tag = 'output window, operand 0, single buffered']
    %8 = vsyncpa [#allocation4], 0
    %9 = vsyncpa [#allocation5], 0
    // Predicated region
    $region2: #{tpu_custom_call.1} parent=1 // pred_check
      _
    $region3: #{tpu_custom_call.1} parent=1 // pred_check_branch
      %11 = sbr.rel (0) target = $region5
    $region4: #{tpu_custom_call.1} parent=1 // pred_region
      _
    $region5: #{tpu_custom_call.1} parent=1 // pred_fallthru
      _
    // Predicated region
    $region6: #{tpu_custom_call.1} parent=1 // pred_check
      _
    $region7: #{tpu_custom_call.1} parent=1 // pred_check_branch
      %13 = sbr.rel (0) target = $region9
    $region8: #{tpu_custom_call.1} parent=1 // pred_region
      %s15 = ssub.s32 256, 256
      %16 = vsyncadd [#allocation4], %s15
      %s18 = sshll.u32 [#allocation3], 4
      %s19 = int_to_ptr.vmem [resolvable:$true] %s18
      %21 = dma.hbm_to_vmem [thread:$0]  %s1, 256, %s19, [#allocation4]
    $region9: #{tpu_custom_call.1} parent=1 // pred_fallthru
      _
    // Predicated region
    $region10: #{tpu_custom_call.1} parent=1 // pred_check
      _
    $region11: #{tpu_custom_call.1} parent=1 // pred_check_branch
      %23 = sbr.rel (0) target = $region13
    $region12: #{tpu_custom_call.1} parent=1 // pred_region
      %24 = dma.done [#allocation4], 256
    $region13: #{tpu_custom_call.1} parent=1 // pred_fallthru
      _
    %s25 = sld [smem:[#allocation2]]
    %v26 = vld [vmem:[#allocation3] sm:$0xff]
    %v27 = vld [vmem:[#allocation3 + $0x8] sm:$0xff]
    %v28 = vstv %s25
    %v29 = vmul.f32 %v26, %v28
    %v30 = vmul.f32 %v27, %v28
    %31 = vst [vmem:[#allocation6] sm:$0xff] %v29
    %32 = vst [vmem:[#allocation6 + $0x8] sm:$0xff] %v30
    // Predicated region
    $region14: #{tpu_custom_call.1} parent=1 // pred_check
      _
    $region15: #{tpu_custom_call.1} parent=1 // pred_check_branch
      %34 = sbr.rel (0) target = $region17
    $region16: #{tpu_custom_call.1} parent=1 // pred_region
      %s36 = ssub.s32 256, 256
      %37 = vsyncadd [#allocation5], %s36
      %s39 = sshll.u32 [#allocation6], 4
      %s40 = int_to_ptr.vmem [resolvable:$true] %s39
      %42 = dma.vmem_to_hbm [thread:$0]  %s40, 256, %s2, [#allocation5]
    $region17: #{tpu_custom_call.1} parent=1 // pred_fallthru
      _
    // Predicated region
    $region18: #{tpu_custom_call.1} parent=1 // pred_check
      _
    $region19: #{tpu_custom_call.1} parent=1 // pred_check_branch
      %44 = sbr.rel (0) target = $region21
    $region20: #{tpu_custom_call.1} parent=1 // pred_region
      %45 = dma.done [#allocation5], 256
    $region21: #{tpu_custom_call.1} parent=1 // pred_fallthru
      _
    %46 = vsyncpa [#allocation4], 1
    %47 = vsyncpa [#allocation5], 1

</llo_original>
